<compile_context>
chip_gen: v5e
topology: v5e:2x2
jax: 0.10.0
libtpu: 0.0.40
codegen_flags: <defaults>
</compile_context>

<pallas_src>
import functools

import jax
import jax.numpy as jnp
from jax.experimental import pallas as pl
from jax.experimental.pallas import tpu as pltpu

LANE = 128     # vreg lane width (last dim)
SUBLANE = 8    # vreg sublane width (second-to-last dim)


def _round_up(x, m):
    return (x + m - 1) // m * m


def _vmem_capacity_bytes():
    """Per-core VMEM capacity; conservative 64 MiB (v7x) if the query fails."""
    try:
        info = pltpu.get_tpu_info()
        cap = int(getattr(info, "vmem_capacity_bytes", 0) or 0)
        if cap > 0:
            return cap
    except Exception:
        pass
    return 64 << 20


def _vmem_limit(working_set_bytes, capacity):
    """Always pass an explicit limit (v5e default is 16 MiB); cap at ~90% of HW."""
    need = int(working_set_bytes) + (8 << 20)          # headroom for compiler scratch
    return min(max(need, 32 << 20), int(capacity * 0.9))


def _largest_tile(dim, max_tile, unit):
    """Largest multiple of `unit` that divides `dim` and is <= max(max_tile, unit)."""
    t = max(unit, (min(dim, max_tile) // unit) * unit)
    while dim % t:
        t -= unit
    return t


# ---------------------------------------------------------------------------
# Fused kernel: one batch tile, all (padded) weights resident in VMEM.
# ---------------------------------------------------------------------------
def mlp_fused_kernel(x_ref, w1_ref, b1_ref, w2_ref, b2_ref, w3_ref, b3_ref, o_ref):
    x = x_ref[...]                                           # (tb, Kp) bf16

    # Layer 1: MXU bf16 matmul, f32 accumulate, f32 bias/ReLU epilogue,
    # then immediately drop back to bf16 (halves live intermediate VMEM).
    h1 = jnp.dot(x, w1_ref[...], preferred_element_type=jnp.float32) + b1_ref[...]
    h1 = jnp.maximum(h1, 0.0).astype(w2_ref.dtype)

    # Layer 2
    h2 = jnp.dot(h1, w2_ref[...], preferred_element_type=jnp.float32) + b2_ref[...]
    h2 = jnp.maximum(h2, 0.0).astype(w3_ref.dtype)

    # Layer 3 (no activation); lane-dense (128-multiple) output store.
    out = jnp.dot(h2, w3_ref[...], preferred_element_type=jnp.float32) + b3_ref[...]
    o_ref[...] = out.astype(o_ref.dtype)


# ---------------------------------------------------------------------------
# Streaming fallback: tiled Linear (+ optional ReLU) with an (M, N, K) grid.
# Used when the resident weights alone exceed the VMEM budget.
# ---------------------------------------------------------------------------
def _linear_kernel(x_ref, w_ref, b_ref, o_ref, acc_ref, *, relu):
    @pl.when(pl.program_id(2) == 0)
    def _():
        acc_ref[...] = jnp.zeros_like(acc_ref)

    acc_ref[...] += jnp.dot(x_ref[...], w_ref[...],
                            preferred_element_type=jnp.float32)

    @pl.when(pl.program_id(2) == pl.num_programs(2) - 1)
    def _():
        out = acc_ref[...] + b_ref[...]
        if relu:
            out = jnp.maximum(out, 0.0)
        o_ref[...] = out.astype(o_ref.dtype)


def _streamed_linear(x, w, b, *, relu, out_dtype, budget_bytes, capacity):
    M, K = x.shape
    N = w.shape[1]
    cbytes = x.dtype.itemsize
    obytes = jnp.dtype(out_dtype).itemsize

    tm = _largest_tile(M, 512, SUBLANE)
    tn = _largest_tile(N, 512, LANE)
    tk = _largest_tile(K, 1024, LANE)

    def tile_bytes(tm_, tn_, tk_):
        return (2 * (tm_ * tk_ + tk_ * tn_) * cbytes    # double-buffered x / w tiles
                + 2 * tm_ * tn_ * obytes                # double-buffered out tile
                + tm_ * tn_ * 4                         # f32 accumulator scratch
                + 2 * SUBLANE * tn_ * 4)                # bias tile

    while tile_bytes(tm, tn, tk) > budget_bytes:
        if tk > LANE:
            tk = _largest_tile(K, tk // 2, LANE)
        elif tn > LANE:
            tn = _largest_tile(N, tn // 2, LANE)
        elif tm > SUBLANE:
            tm = _largest_tile(M, tm // 2, SUBLANE)
        else:
            break

    grid = (M // tm, N // tn, K // tk)
    kernel = functools.partial(_linear_kernel, relu=relu)
    return pl.pallas_call(
        kernel,
        out_shape=jax.ShapeDtypeStruct((M, N), out_dtype),
        grid=grid,
        in_specs=[
            pl.BlockSpec((tm, tk), lambda i, j, k: (i, k)),
            pl.BlockSpec((tk, tn), lambda i, j, k: (k, j)),
            pl.BlockSpec((1, tn), lambda i, j, k: (0, j)),
        ],
        out_specs=pl.BlockSpec((tm, tn), lambda i, j, k: (i, j)),
        scratch_shapes=[pltpu.VMEM((tm, tn), jnp.float32)],
        compiler_params=pltpu.CompilerParams(
            dimension_semantics=("parallel", "parallel", "arbitrary"),
            vmem_limit_bytes=_vmem_limit(tile_bytes(tm, tn, tk), capacity)),
    )(x, w, b)


# ---------------------------------------------------------------------------
# Tiling / VMEM sizing for the fused path
# ---------------------------------------------------------------------------
def _pick_batch_tile(B, Kp, H1p, H2p, Np, cbytes, obytes, *, max_tb, budget_bytes):
    """Largest batch tile whose working set fits `budget_bytes`.

    Weights/biases are counted TWICE: the BlockSpec pipeline keeps 2 buffers per
    input even for a constant index_map (honest budget math instead of relying on
    pipeline_mode=pl.Buffered(1), which we deliberately avoid for portability)."""
    fixed = 2 * (Kp * H1p + H1p * H2p + H2p * Np) * cbytes      # resident weights x2
    fixed += 2 * SUBLANE * (H1p + H2p + Np) * 4                 # f32 biases x2 (sublane-padded)
    per_row = 2 * (Kp * cbytes + Np * obytes)                   # double-buffered x / out
    per_row += (H1p + H2p) * cbytes                             # bf16 inter-layer activations

    tb = _round_up(min(max_tb, _round_up(B, SUBLANE)), SUBLANE)
    while tb > SUBLANE and fixed + tb * per_row > budget_bytes:
        tb = _round_up(max(tb // 2, SUBLANE), SUBLANE)
    working_set = fixed + tb * per_row
    return tb, working_set, working_set <= budget_bytes


# ---------------------------------------------------------------------------
# Parameter preparation (hoisted out of the per-forward path) + forward wrapper
# ---------------------------------------------------------------------------
def prepare_mlp_params(params, *, compute_dtype=jnp.bfloat16):
    """Pad every feature axis to a multiple of 128 and cast weights to bf16 ONCE.
    Zero padding is exact for Linear+ReLU. Biases stay f32 (f32 epilogue)."""
    w1, b1, w2, b2, w3, b3 = (params[k] for k in ("w1", "b1", "w2", "b2", "w3", "b3"))
    K, H1 = w1.shape
    H2, N = w2.shape[1], w3.shape[1]
    Kp, H1p, H2p, Np = (_round_up(d, LANE) for d in (K, H1, H2, N))

    def pad2(a, rows, cols):
        return jnp.pad(a, ((0, rows - a.shape[0]), (0, cols - a.shape[1])))

    return {
        "w1": pad2(w1, Kp, H1p).astype(compute_dtype),
        "w2": pad2(w2, H1p, H2p).astype(compute_dtype),
        "w3": pad2(w3, H2p, Np).astype(compute_dtype),
        "b1": pad2(b1, 1, H1p).astype(jnp.float32),
        "b2": pad2(b2, 1, H2p).astype(jnp.float32),
        "b3": pad2(b3, 1, Np).astype(jnp.float32),
    }


def mlp_forward(x, padded_params, out_features, *,
                out_dtype=jnp.float32,      # bf16 halves output writeback if acceptable
                max_batch_tile=1024,
                force_stream=False):
    """x: (B, input_size) f32; padded_params: output of prepare_mlp_params."""
    w1p, b1p = padded_params["w1"], padded_params["b1"]
    w2p, b2p = padded_params["w2"], padded_params["b2"]
    w3p, b3p = padded_params["w3"], padded_params["b3"]

    B, K = x.shape
    Kp, H1p = w1p.shape
    H2p, Np = w2p.shape[1], w3p.shape[1]
    N = out_features

    cbytes = w1p.dtype.itemsize
    obytes = jnp.dtype(out_dtype).itemsize
    capacity = _vmem_capacity_bytes()
    budget = int(capacity * 0.75)            # ~96 MiB on 128 MiB parts, ~48 MiB on v7x

    tb, working_set, fits = _pick_batch_tile(
        B, Kp, H1p, H2p, Np, cbytes, obytes,
        max_tb=max_batch_tile, budget_bytes=budget)

    # Guarantee >= 2 batch tiles when the batch allows, so the "parallel" axis
    # can be split across v7x's two TensorCores (negligible cost on v5e/v6e).
    b_rows = _round_up(B, SUBLANE)
    if b_rows >= 2 * SUBLANE:
        tb = min(tb, _round_up((b_rows + 1) // 2, SUBLANE))
    Bp = _round_up(max(B, tb), tb)

    # Per-call work on the activation only (weights were prepared once).
    xp = x
    if (Bp, Kp) != (B, K):
        xp = jnp.pad(x, ((0, Bp - B), (0, Kp - K)))
    xp = xp.astype(w1p.dtype)

    if fits and not force_stream:
        resident = lambda arr: pl.BlockSpec(arr.shape, lambda i: (0, 0))
        out_padded = pl.pallas_call(
            mlp_fused_kernel,
            out_shape=jax.ShapeDtypeStruct((Bp, Np), out_dtype),
            grid=(Bp // tb,),
            in_specs=[
                pl.BlockSpec((tb, Kp), lambda i: (i, 0)),   # x: batch-tiled
                resident(w1p), resident(b1p),
                resident(w2p), resident(b2p),
                resident(w3p), resident(b3p),
            ],
            out_specs=pl.BlockSpec((tb, Np), lambda i: (i, 0)),
            compiler_params=pltpu.CompilerParams(
                dimension_semantics=("parallel",),
                vmem_limit_bytes=_vmem_limit(working_set, capacity)),
        )(xp, w1p, b1p, w2p, b2p, w3p, b3p)
    else:
        # Weight-streaming fallback: three tiled matmul+bias(+ReLU) pallas_calls,
        # each with an (M, N, K) grid and an f32 VMEM accumulator.
        h1 = _streamed_linear(xp, w1p, b1p, relu=True, out_dtype=w1p.dtype,
                              budget_bytes=budget, capacity=capacity)
        h2 = _streamed_linear(h1, w2p, b2p, relu=True, out_dtype=w2p.dtype,
                              budget_bytes=budget, capacity=capacity)
        out_padded = _streamed_linear(h2, w3p, b3p, relu=False, out_dtype=out_dtype,
                                      budget_bytes=budget, capacity=capacity)

    return out_padded[:B, :N]


# ---------------------------------------------------------------------------
# Init + reference
# ---------------------------------------------------------------------------
def init_mlp_params(key, input_size, common_size, dtype=jnp.float32):
    """Mimics nn.Linear default U(-1/sqrt(fan_in), 1/sqrt(fan_in)).
    Weights stored (in_features, out_features), i.e. transposed vs PyTorch."""
    h1 = input_size // 2
    h2 = input_size // 4
    dims = [(input_size, h1), (h1, h2), (h2, common_size)]
    params = {}
    for idx, (fan_in, fan_out) in enumerate(dims, start=1):
        key, kw, kb = jax.random.split(key, 3)
        bound = 1.0 / jnp.sqrt(jnp.asarray(fan_in, dtype=jnp.float32))
        params[f"w{idx}"] = jax.random.uniform(
            kw, (fan_in, fan_out), dtype=dtype, minval=-bound, maxval=bound)
        params[f"b{idx}"] = jax.random.uniform(
            kb, (1, fan_out), dtype=dtype, minval=-bound, maxval=bound)
    return params


def mlp_reference(x, params, compute_dtype=jnp.bfloat16):
    """Pure-JAX reference with the same bf16 matmul inputs / f32 accumulation."""
    cd = compute_dtype
    h1 = jnp.maximum(
        jnp.dot(x.astype(cd), params["w1"].astype(cd),
                preferred_element_type=jnp.float32) + params["b1"], 0.0)
    h2 = jnp.maximum(
        jnp.dot(h1.astype(cd), params["w2"].astype(cd),
                preferred_element_type=jnp.float32) + params["b2"], 0.0)
    return jnp.dot(h2.astype(cd), params["w3"].astype(cd),
                   preferred_element_type=jnp.float32) + params["b3"]


if __name__ == "__main__":
    key = jax.random.PRNGKey(0)
    kx, kp = jax.random.split(key)

    batch = 8
    input_size = 32
    common_size = 4

    x = jax.random.normal(kx, (batch, input_size), dtype=jnp.float32)
    params = init_mlp_params(kp, input_size, common_size)

    padded = prepare_mlp_params(params)          # hoisted: pad/cast weights once
    fwd = jax.jit(mlp_forward, static_argnums=(2,), static_argnames=("force_stream",))

    out = jax.block_until_ready(fwd(x, padded, common_size))
    ref = mlp_reference(x, params)
    assert out.shape == (batch, common_size)
    # bf16 matmul inputs -> relaxed tolerance (f32 accumulation keeps it tight).
    assert jnp.allclose(out, ref, atol=1e-2, rtol=1e-2), "fused Pallas output mismatch"

    # Also exercise the weight-streaming fallback path (same math, tiled grid).
    out_s = jax.block_until_ready(fwd(x, padded, common_size, force_stream=True))
    assert out_s.shape == (batch, common_size)
    assert jnp.allclose(out_s, ref, atol=1e-2, rtol=1e-2), "streamed Pallas output mismatch"

    print("KERNEL_OK")
</pallas_src>

<mosaic_0001>
module attributes {stable_mosaic.version = 11 : i64} {
  func.func @mlp_fused_kernel(%arg0: i32, %arg1: memref<8x128xbf16, #tpu.memory_space<vmem>>, %arg2: memref<128x128xbf16, #tpu.memory_space<vmem>>, %arg3: memref<1x128xf32, #tpu.memory_space<vmem>>, %arg4: memref<128x128xbf16, #tpu.memory_space<vmem>>, %arg5: memref<1x128xf32, #tpu.memory_space<vmem>>, %arg6: memref<128x128xbf16, #tpu.memory_space<vmem>>, %arg7: memref<1x128xf32, #tpu.memory_space<vmem>>, %arg8: memref<8x128xf32, #tpu.memory_space<vmem>>) attributes {dimension_semantics = [#tpu.dimension_semantics<parallel>], iteration_bounds = array<i64: 1>, scalar_prefetch = 0 : i64, scratch_operands = 0 : i64, tpu.core_type = #tpu.core_type<tc>, window_params = [{transform_indices = @transform_0, window_bounds = array<i64: 8, 128>}, {pipeline_mode = #tpu.pipeline_mode<synchronous>, transform_indices = @transform_1, window_bounds = array<i64: 128, 128>}, {pipeline_mode = #tpu.pipeline_mode<synchronous>, transform_indices = @transform_2, window_bounds = array<i64: 1, 128>}, {pipeline_mode = #tpu.pipeline_mode<synchronous>, transform_indices = @transform_3, window_bounds = array<i64: 128, 128>}, {pipeline_mode = #tpu.pipeline_mode<synchronous>, transform_indices = @transform_4, window_bounds = array<i64: 1, 128>}, {pipeline_mode = #tpu.pipeline_mode<synchronous>, transform_indices = @transform_5, window_bounds = array<i64: 128, 128>}, {pipeline_mode = #tpu.pipeline_mode<synchronous>, transform_indices = @transform_6, window_bounds = array<i64: 1, 128>}, {transform_indices = @transform_7, window_bounds = array<i64: 8, 128>}]} {
    %c0 = arith.constant 0 : index
    %c0_0 = arith.constant 0 : index
    %0 = vector.load %arg1[%c0, %c0_0] : memref<8x128xbf16, #tpu.memory_space<vmem>>, vector<8x128xbf16>
    %c0_1 = arith.constant 0 : index
    %c0_2 = arith.constant 0 : index
    %1 = vector.load %arg2[%c0_1, %c0_2] : memref<128x128xbf16, #tpu.memory_space<vmem>>, vector<128x128xbf16>
    %cst = arith.constant dense<0.000000e+00> : vector<8x128xf32>
    %2 = tpu.matmul %0, %1, %cst {dimension_numbers = #tpu.dot_dimension_numbers<[1], [0], [0], [1], [0, 0, 1, 1], [], []>} : vector<8x128xbf16>, vector<128x128xbf16>, vector<8x128xf32> -> vector<8x128xf32>
    %c0_3 = arith.constant 0 : index
    %c0_4 = arith.constant 0 : index
    %3 = vector.load %arg3[%c0_3, %c0_4] : memref<1x128xf32, #tpu.memory_space<vmem>>, vector<1x128xf32>
    %4 = vector.broadcast %3 : vector<1x128xf32> to vector<8x128xf32>
    %5 = arith.addf %2, %4 : vector<8x128xf32>
    %cst_5 = arith.constant 0.000000e+00 : f32
    %6 = vector.broadcast %cst_5 : f32 to vector<8x128xf32>
    %7 = arith.maximumf %5, %6 : vector<8x128xf32>
    %8 = arith.truncf %7 : vector<8x128xf32> to vector<8x128xbf16>
    %c0_6 = arith.constant 0 : index
    %c0_7 = arith.constant 0 : index
    %9 = vector.load %arg4[%c0_6, %c0_7] : memref<128x128xbf16, #tpu.memory_space<vmem>>, vector<128x128xbf16>
    %cst_8 = arith.constant dense<0.000000e+00> : vector<8x128xf32>
    %10 = tpu.matmul %8, %9, %cst_8 {dimension_numbers = #tpu.dot_dimension_numbers<[1], [0], [0], [1], [0, 0, 1, 1], [], []>} : vector<8x128xbf16>, vector<128x128xbf16>, vector<8x128xf32> -> vector<8x128xf32>
    %c0_9 = arith.constant 0 : index
    %c0_10 = arith.constant 0 : index
    %11 = vector.load %arg5[%c0_9, %c0_10] : memref<1x128xf32, #tpu.memory_space<vmem>>, vector<1x128xf32>
    %12 = vector.broadcast %11 : vector<1x128xf32> to vector<8x128xf32>
    %13 = arith.addf %10, %12 : vector<8x128xf32>
    %cst_11 = arith.constant 0.000000e+00 : f32
    %14 = vector.broadcast %cst_11 : f32 to vector<8x128xf32>
    %15 = arith.maximumf %13, %14 : vector<8x128xf32>
    %16 = arith.truncf %15 : vector<8x128xf32> to vector<8x128xbf16>
    %c0_12 = arith.constant 0 : index
    %c0_13 = arith.constant 0 : index
    %17 = vector.load %arg6[%c0_12, %c0_13] : memref<128x128xbf16, #tpu.memory_space<vmem>>, vector<128x128xbf16>
    %cst_14 = arith.constant dense<0.000000e+00> : vector<8x128xf32>
    %18 = tpu.matmul %16, %17, %cst_14 {dimension_numbers = #tpu.dot_dimension_numbers<[1], [0], [0], [1], [0, 0, 1, 1], [], []>} : vector<8x128xbf16>, vector<128x128xbf16>, vector<8x128xf32> -> vector<8x128xf32>
    %c0_15 = arith.constant 0 : index
    %c0_16 = arith.constant 0 : index
    %19 = vector.load %arg7[%c0_15, %c0_16] : memref<1x128xf32, #tpu.memory_space<vmem>>, vector<1x128xf32>
    %20 = vector.broadcast %19 : vector<1x128xf32> to vector<8x128xf32>
    %21 = arith.addf %18, %20 : vector<8x128xf32>
    %c0_17 = arith.constant 0 : index
    %c0_18 = arith.constant 0 : index
    %22 = vector.load %arg8[%c0_17, %c0_18] : memref<8x128xf32, #tpu.memory_space<vmem>>, vector<8x128xf32>
    tpu.vector_store %arg8[%c0_17, %c0_18], %21 {strides = array<i32>} : memref<8x128xf32, #tpu.memory_space<vmem>>, vector<8x128xf32>,
    return
  }
  func.func @transform_0(%arg0: i32) -> (i32, i32) {
    %c0_i32 = arith.constant 0 : i32
    %c0_i32_0 = arith.constant 0 : i32
    return %arg0, %c0_i32 : i32, i32
  }
  func.func @transform_1(%arg0: i32) -> (i32, i32) {
    %c0_i32 = arith.constant 0 : i32
    %c0_i32_0 = arith.constant 0 : i32
    %c0_i32_1 = arith.constant 0 : i32
    return %c0_i32, %c0_i32_0 : i32, i32
  }
  func.func @transform_2(%arg0: i32) -> (i32, i32) {
    %c0_i32 = arith.constant 0 : i32
    %c0_i32_0 = arith.constant 0 : i32
    %c0_i32_1 = arith.constant 0 : i32
    return %c0_i32, %c0_i32_0 : i32, i32
  }
  func.func @transform_3(%arg0: i32) -> (i32, i32) {
    %c0_i32 = arith.constant 0 : i32
    %c0_i32_0 = arith.constant 0 : i32
    %c0_i32_1 = arith.constant 0 : i32
    return %c0_i32, %c0_i32_0 : i32, i32
  }
  func.func @transform_4(%arg0: i32) -> (i32, i32) {
    %c0_i32 = arith.constant 0 : i32
    %c0_i32_0 = arith.constant 0 : i32
    %c0_i32_1 = arith.constant 0 : i32
    return %c0_i32, %c0_i32_0 : i32, i32
  }
  func.func @transform_5(%arg0: i32) -> (i32, i32) {
    %c0_i32 = arith.constant 0 : i32
    %c0_i32_0 = arith.constant 0 : i32
    %c0_i32_1 = arith.constant 0 : i32
    return %c0_i32, %c0_i32_0 : i32, i32
  }
  func.func @transform_6(%arg0: i32) -> (i32, i32) {
    %c0_i32 = arith.constant 0 : i32
    %c0_i32_0 = arith.constant 0 : i32
    %c0_i32_1 = arith.constant 0 : i32
    return %c0_i32, %c0_i32_0 : i32, i32
  }
  func.func @transform_7(%arg0: i32) -> (i32, i32) {
    %c0_i32 = arith.constant 0 : i32
    %c0_i32_0 = arith.constant 0 : i32
    return %arg0, %c0_i32 : i32, i32
  }
}

</mosaic_0001>

<llo_original>
// kernel: mlp_forward.1
$region0: #{mlp_forward.1}
  #allocation0 [shape = 'u32[]', space=smem, size = 0x4, offset = 0x4, fixed_abs, tag = 'smem constant byte address 0x4 - core index']
  #allocation1 [shape = 'u32[72,128]{1,0:T(1,128)}', space=vmem, size = 0x9000, scoped, tag = 'internal scratch']
  %s0 = inlined_call_operand.vmem [shape: bf16[8,128], index: 0, kind: input, shape index: {}]
  %s1 = inlined_call_operand.hbm [shape: bf16[128,128], index: 1, kind: input, shape index: {}]
  %s2 = inlined_call_operand.vmem [shape: f32[1,128], index: 2, kind: input, shape index: {}]
  %s3 = inlined_call_operand.hbm [shape: bf16[128,128], index: 3, kind: input, shape index: {}]
  %s4 = inlined_call_operand.vmem [shape: f32[1,128], index: 4, kind: input, shape index: {}]
  %s5 = inlined_call_operand.hbm [shape: bf16[128,128], index: 5, kind: input, shape index: {}]
  %s6 = inlined_call_operand.vmem [shape: f32[1,128], index: 6, kind: input, shape index: {}]
  %s7 = inlined_call_operand.vmem [shape: f32[8,128], index: 7, kind: output, shape index: {}]
  %s8 = sld [smem:[#allocation0]]
  $region50: #{mlp_forward.1} parent=0
    _
  %s10 = ssub.s32 1, %s8
  %s11 = scalar_select 0, %s10, %s8
  $region1: #{mlp_forward.1} parent=0
    #allocation2 [shape = 'u8[32768]{0}', space=vmem, size = 0x8000, scoped, tag = 'input window, operand 1, single buffered']
    #allocation3 [shape = 's32[1]{0}', space=sflag, size = 0x4, scoped, tag = 'scoped memory for mlp_forward.1']
    #allocation4 [shape = 'u8[32768]{0}', space=vmem, size = 0x8000, scoped, tag = 'input window, operand 3, single buffered']
    #allocation5 [shape = 's32[1]{0}', space=sflag, size = 0x4, scoped, tag = 'scoped memory for mlp_forward.1']
    #allocation6 [shape = 'u8[32768]{0}', space=vmem, size = 0x8000, scoped, tag = 'input window, operand 5, single buffered']
    %12 = vsyncpa [#allocation3], 0
    %13 = vsyncpa [#allocation5], 0
    // Predicated region
    $region2: #{mlp_forward.1} parent=1 // pred_check
      _
    $region3: #{mlp_forward.1} parent=1 // pred_check_branch
      %15 = sbr.rel (0) target = $region5
    $region4: #{mlp_forward.1} parent=1 // pred_region
      _
    $region5: #{mlp_forward.1} parent=1 // pred_fallthru
      _
    // Predicated region
    $region6: #{mlp_forward.1} parent=1 // pred_check
      _
    $region7: #{mlp_forward.1} parent=1 // pred_check_branch
      %17 = sbr.rel (0) target = $region9
    $region8: #{mlp_forward.1} parent=1 // pred_region
      %19 = vsyncadd [#allocation3], 0
      %s20 = sshll.u32 %s1, 4
      %s21 = int_to_ptr.hbm [resolvable:$true] %s20
      %s22 = sshll.u32 [#allocation2], 4
      %s23 = int_to_ptr.vmem [resolvable:$true] %s22
      %28 = dma.hbm_to_vmem [thread:$0]  %s21, 1024, %s23, [#allocation3], 64, 64, 4
    $region9: #{mlp_forward.1} parent=1 // pred_fallthru
      _
    // Predicated region
    $region10: #{mlp_forward.1} parent=1 // pred_check
      _
    $region11: #{mlp_forward.1} parent=1 // pred_check_branch
      %30 = sbr.rel (0) target = $region13
    $region12: #{mlp_forward.1} parent=1 // pred_region
      _
    $region13: #{mlp_forward.1} parent=1 // pred_fallthru
      _
    // Predicated region
    $region14: #{mlp_forward.1} parent=1 // pred_check
      _
    $region15: #{mlp_forward.1} parent=1 // pred_check_branch
      %32 = sbr.rel (0) target = $region17
    $region16: #{mlp_forward.1} parent=1 // pred_region
      %34 = vsyncadd [#allocation5], 0
      %s35 = sshll.u32 %s3, 4
      %s36 = int_to_ptr.hbm [resolvable:$true] %s35
      %s37 = sshll.u32 [#allocation4], 4
      %s38 = int_to_ptr.vmem [resolvable:$true] %s37
      %43 = dma.hbm_to_vmem [thread:$0]  %s36, 1024, %s38, [#allocation5], 64, 64, 4
    $region17: #{mlp_forward.1} parent=1 // pred_fallthru
      _
    // Predicated region
    $region18: #{mlp_forward.1} parent=1 // pred_check
      _
    $region19: #{mlp_forward.1} parent=1 // pred_check_branch
      %45 = sbr.rel (0) target = $region21
    $region20: #{mlp_forward.1} parent=1 // pred_region
      _
    $region21: #{mlp_forward.1} parent=1 // pred_fallthru
      _
    // Predicated region
    $region22: #{mlp_forward.1} parent=1 // pred_check
      _
    $region23: #{mlp_forward.1} parent=1 // pred_check_branch
      %47 = sbr.rel (0) target = $region25
    $region24: #{mlp_forward.1} parent=1 // pred_region
      %49 = vsyncadd [#allocation5], 0
      %s50 = sshll.u32 %s5, 4
      %s51 = int_to_ptr.hbm [resolvable:$true] %s50
      %s52 = sshll.u32 [#allocation6], 4
      %s53 = int_to_ptr.vmem [resolvable:$true] %s52
      %58 = dma.hbm_to_vmem [thread:$0]  %s51, 1024, %s53, [#allocation5], 64, 64, 4
    $region25: #{mlp_forward.1} parent=1 // pred_fallthru
      _
    // Predicated region
    $region26: #{mlp_forward.1} parent=1 // pred_check
      _
    $region27: #{mlp_forward.1} parent=1 // pred_check_branch
      %60 = sbr.rel (0) target = $region29
    $region28: #{mlp_forward.1} parent=1 // pred_region
      _
    $region29: #{mlp_forward.1} parent=1 // pred_fallthru
      _
    // Predicated region
    $region30: #{mlp_forward.1} parent=1 // pred_check
      _
    $region31: #{mlp_forward.1} parent=1 // pred_check_branch
      %62 = sbr.rel (0) target = $region33
    $region32: #{mlp_forward.1} parent=1 // pred_region
      %64 = dma.done [#allocation3], 1024
    $region33: #{mlp_forward.1} parent=1 // pred_fallthru
      _
    // Predicated region
    $region34: #{mlp_forward.1} parent=1 // pred_check
      _
    $region35: #{mlp_forward.1} parent=1 // pred_check_branch
      %66 = sbr.rel (0) target = $region37
    $region36: #{mlp_forward.1} parent=1 // pred_region
      %68 = dma.done [#allocation5], 1024
    $region37: #{mlp_forward.1} parent=1 // pred_fallthru
      _
    // Predicated region
    $region38: #{mlp_forward.1} parent=1 // pred_check
      _
    $region39: #{mlp_forward.1} parent=1 // pred_check_branch
      %70 = sbr.rel (0) target = $region41
    $region40: #{mlp_forward.1} parent=1 // pred_region
      %72 = dma.done [#allocation5], 1024
    $region41: #{mlp_forward.1} parent=1 // pred_fallthru
      _
    %v73 = vld [vmem:[%s0] sm:$0xf]
    %v74 = vld [vmem:[#allocation2] sm:$0xf]
    %v75 = vld [vmem:[#allocation2 + $0x4] sm:$0xf]
    %v76 = vld [vmem:[#allocation2 + $0x8] sm:$0xf]
    %v77 = vld [vmem:[#allocation2 + $0xc] sm:$0xf]
    %v78 = vld [vmem:[#allocation2 + $0x10] sm:$0xf]
    %v79 = vld [vmem:[#allocation2 + $0x14] sm:$0xf]
    %v80 = vld [vmem:[#allocation2 + $0x18] sm:$0xf]
    %v81 = vld [vmem:[#allocation2 + $0x1c] sm:$0xf]
    %v82 = vld [vmem:[#allocation2 + $0x20] sm:$0xf]
    %v83 = vld [vmem:[#allocation2 + $0x24] sm:$0xf]
    %v84 = vld [vmem:[#allocation2 + $0x28] sm:$0xf]
    %v85 = vld [vmem:[#allocation2 + $0x2c] sm:$0xf]
    %v86 = vld [vmem:[#allocation2 + $0x30] sm:$0xf]
    %v87 = vld [vmem:[#allocation2 + $0x34] sm:$0xf]
    %v88 = vld [vmem:[#allocation2 + $0x38] sm:$0xf]
    %v89 = vld [vmem:[#allocation2 + $0x3c] sm:$0xf]
    %v90 = vld [vmem:[%s2] sm:$0x1]
    %v92 = vperm.slane %v90, 0
    %v110 = vunpack.c.l.b16 %v74
    %v111 = vunpack.c.l.b16 %v75
    %v112 = vunpack.c.l.b16 %v76
    %v113 = vunpack.c.l.b16 %v77
    %v114 = vunpack.c.l.b16 %v78
    %v115 = vunpack.c.l.b16 %v79
    %v116 = vunpack.c.l.b16 %v80
    %v117 = vunpack.c.l.b16 %v81
    %v118 = vunpack.c.l.b16 %v82
    %v119 = vunpack.c.l.b16 %v83
    %v120 = vunpack.c.l.b16 %v84
    %v121 = vunpack.c.l.b16 %v85
    %v122 = vunpack.c.l.b16 %v86
    %v123 = vunpack.c.l.b16 %v87
    %v124 = vunpack.c.l.b16 %v88
    %v125 = vunpack.c.l.b16 %v89
    %v126 = vpack.c.b16 %v111, %v110
    %v127 = vpack.c.b16 %v113, %v112
    %v128 = vpack.c.b16 %v115, %v114
    %v129 = vpack.c.b16 %v117, %v116
    %v130 = vpack.c.b16 %v119, %v118
    %v131 = vpack.c.b16 %v121, %v120
    %v132 = vpack.c.b16 %v123, %v122
    %v133 = vpack.c.b16 %v125, %v124
    %142 = vmatpush.bf16.msra.mxu0 %v133
    %143 = vmatpush.bf16.msra.mxu0 %v132
    %144 = vmatpush.bf16.msra.mxu0 %v131
    %145 = vmatpush.bf16.msra.mxu0 %v130
    %146 = vmatpush.bf16.msra.mxu0 %v129
    %147 = vmatpush.bf16.msra.mxu0 %v128
    %148 = vmatpush.bf16.msra.mxu0 %v127
    %149 = vmatpush.bf16.msra.mxu0 %v126
    %150 = vmatmul.bf16.gmra.mxu0 %v73
    %v151 = vpop.f32.mrf.mxu0
    %v152 = vadd.f32 %v92, %v151
    %v153 = vpop.f32.mrf.mxu0
    %154 = vdwg.mxu0
    %v155 = vmax.f32 %v152, 0.0
    %v156 = vpack.c.bf16 %v155, %v155
    %v157 = vld [vmem:[#allocation4] sm:$0xf]
    %v158 = vld [vmem:[#allocation4 + $0x4] sm:$0xf]
    %v159 = vld [vmem:[#allocation4 + $0x8] sm:$0xf]
    %v160 = vld [vmem:[#allocation4 + $0xc] sm:$0xf]
    %v161 = vld [vmem:[#allocation4 + $0x10] sm:$0xf]
    %v162 = vld [vmem:[#allocation4 + $0x14] sm:$0xf]
    %v163 = vld [vmem:[#allocation4 + $0x18] sm:$0xf]
    %v164 = vld [vmem:[#allocation4 + $0x1c] sm:$0xf]
    %v165 = vld [vmem:[#allocation4 + $0x20] sm:$0xf]
    %v166 = vld [vmem:[#allocation4 + $0x24] sm:$0xf]
    %v167 = vld [vmem:[#allocation4 + $0x28] sm:$0xf]
    %v168 = vld [vmem:[#allocation4 + $0x2c] sm:$0xf]
    %v169 = vld [vmem:[#allocation4 + $0x30] sm:$0xf]
    %v170 = vld [vmem:[#allocation4 + $0x34] sm:$0xf]
    %v171 = vld [vmem:[#allocation4 + $0x38] sm:$0xf]
    %v172 = vld [vmem:[#allocation4 + $0x3c] sm:$0xf]
    %v173 = vld [vmem:[%s4] sm:$0x1]
    %v175 = vperm.slane %v173, 0
    %v193 = vunpack.c.l.b16 %v157
    %v194 = vunpack.c.l.b16 %v158
    %v195 = vunpack.c.l.b16 %v159
    %v196 = vunpack.c.l.b16 %v160
    %v197 = vunpack.c.l.b16 %v161
    %v198 = vunpack.c.l.b16 %v162
    %v199 = vunpack.c.l.b16 %v163
    %v200 = vunpack.c.l.b16 %v164
    %v201 = vunpack.c.l.b16 %v165
    %v202 = vunpack.c.l.b16 %v166
    %v203 = vunpack.c.l.b16 %v167
    %v204 = vunpack.c.l.b16 %v168
    %v205 = vunpack.c.l.b16 %v169
    %v206 = vunpack.c.l.b16 %v170
    %v207 = vunpack.c.l.b16 %v171
    %v208 = vunpack.c.l.b16 %v172
    %v209 = vpack.c.b16 %v194, %v193
    %v210 = vpack.c.b16 %v196, %v195
    %v211 = vpack.c.b16 %v198, %v197
    %v212 = vpack.c.b16 %v200, %v199
    %v213 = vpack.c.b16 %v202, %v201
    %v214 = vpack.c.b16 %v204, %v203
    %v215 = vpack.c.b16 %v206, %v205
    %v216 = vpack.c.b16 %v208, %v207
    %225 = vmatpush.bf16.msra.mxu0 %v216
    %226 = vmatpush.bf16.msra.mxu0 %v215
    %227 = vmatpush.bf16.msra.mxu0 %v214
    %228 = vmatpush.bf16.msra.mxu0 %v213
    %229 = vmatpush.bf16.msra.mxu0 %v212
    %230 = vmatpush.bf16.msra.mxu0 %v211
    %231 = vmatpush.bf16.msra.mxu0 %v210
    %232 = vmatpush.bf16.msra.mxu0 %v209
    %233 = vmatmul.bf16.gmra.mxu0 %v156
    %v234 = vpop.f32.mrf.mxu0
    %v235 = vadd.f32 %v175, %v234
    %v236 = vpop.f32.mrf.mxu0
    %237 = vdwg.mxu0
    %v238 = vmax.f32 %v235, 0.0
    %v239 = vpack.c.bf16 %v238, %v238
    %v240 = vld [vmem:[#allocation6] sm:$0xf]
    %v241 = vld [vmem:[#allocation6 + $0x4] sm:$0xf]
    %v242 = vld [vmem:[#allocation6 + $0x8] sm:$0xf]
    %v243 = vld [vmem:[#allocation6 + $0xc] sm:$0xf]
    %v244 = vld [vmem:[#allocation6 + $0x10] sm:$0xf]
    %v245 = vld [vmem:[#allocation6 + $0x14] sm:$0xf]
    %v246 = vld [vmem:[#allocation6 + $0x18] sm:$0xf]
    %v247 = vld [vmem:[#allocation6 + $0x1c] sm:$0xf]
    %v248 = vld [vmem:[#allocation6 + $0x20] sm:$0xf]
    %v249 = vld [vmem:[#allocation6 + $0x24] sm:$0xf]
    %v250 = vld [vmem:[#allocation6 + $0x28] sm:$0xf]
    %v251 = vld [vmem:[#allocation6 + $0x2c] sm:$0xf]
    %v252 = vld [vmem:[#allocation6 + $0x30] sm:$0xf]
    %v253 = vld [vmem:[#allocation6 + $0x34] sm:$0xf]
    %v254 = vld [vmem:[#allocation6 + $0x38] sm:$0xf]
    %v255 = vld [vmem:[#allocation6 + $0x3c] sm:$0xf]
    %v256 = vld [vmem:[%s6] sm:$0x1]
    %v258 = vperm.slane %v256, 0
    %v276 = vunpack.c.l.b16 %v240
    %v277 = vunpack.c.l.b16 %v241
    %v278 = vunpack.c.l.b16 %v242
    %v279 = vunpack.c.l.b16 %v243
    %v280 = vunpack.c.l.b16 %v244
    %v281 = vunpack.c.l.b16 %v245
    %v282 = vunpack.c.l.b16 %v246
    %v283 = vunpack.c.l.b16 %v247
    %v284 = vunpack.c.l.b16 %v248
    %v285 = vunpack.c.l.b16 %v249
    %v286 = vunpack.c.l.b16 %v250
    %v287 = vunpack.c.l.b16 %v251
    %v288 = vunpack.c.l.b16 %v252
    %v289 = vunpack.c.l.b16 %v253
    %v290 = vunpack.c.l.b16 %v254
    %v291 = vunpack.c.l.b16 %v255
    %v292 = vpack.c.b16 %v277, %v276
    %v293 = vpack.c.b16 %v279, %v278
    %v294 = vpack.c.b16 %v281, %v280
    %v295 = vpack.c.b16 %v283, %v282
    %v296 = vpack.c.b16 %v285, %v284
    %v297 = vpack.c.b16 %v287, %v286
    %v298 = vpack.c.b16 %v289, %v288
    %v299 = vpack.c.b16 %v291, %v290
    %308 = vmatpush.bf16.msra.mxu0 %v299
    %309 = vmatpush.bf16.msra.mxu0 %v298
    %310 = vmatpush.bf16.msra.mxu0 %v297
    %311 = vmatpush.bf16.msra.mxu0 %v296
    %312 = vmatpush.bf16.msra.mxu0 %v295
    %313 = vmatpush.bf16.msra.mxu0 %v294
    %314 = vmatpush.bf16.msra.mxu0 %v293
    %315 = vmatpush.bf16.msra.mxu0 %v292
    %316 = vmatmul.bf16.gmra.mxu0 %v239
    %v317 = vpop.f32.mrf.mxu0
    %v318 = vadd.f32 %v258, %v317
    %v319 = vpop.f32.mrf.mxu0
    %320 = vdwg.mxu0
    %321 = vst [vmem:[%s7] sm:$0xff] %v318
    // Predicated region
    $region42: #{mlp_forward.1} parent=1 // pred_check
      _
    $region43: #{mlp_forward.1} parent=1 // pred_check_branch
      %323 = sbr.rel (0) target = $region45
    $region44: #{mlp_forward.1} parent=1 // pred_region
      _
    $region45: #{mlp_forward.1} parent=1 // pred_fallthru
      _
    // Predicated region
    $region46: #{mlp_forward.1} parent=1 // pred_check
      _
    $region47: #{mlp_forward.1} parent=1 // pred_check_branch
      %325 = sbr.rel (0) target = $region49
    $region48: #{mlp_forward.1} parent=1 // pred_region
      _
    $region49: #{mlp_forward.1} parent=1 // pred_fallthru
      _
    %326 = vsyncpa [#allocation3], 1
    %327 = vsyncpa [#allocation5], 1

</llo_original>
